<compile_context>
chip_gen: v7x
topology: tpu7x:2x2x1
jax: 0.10.0
libtpu: 0.0.40
codegen_flags: <defaults>
</compile_context>

<pallas_src>
import functools

import jax
import jax.numpy as jnp
from jax.experimental import pallas as pl
from jax.experimental.pallas import tpu as pltpu


def _round_up(x, m):
    return (x + m - 1) // m * m


def _cdiv(a, b):
    return (a + b - 1) // b


def _ncf_kernel(ue_ref, ie_ref, um_ref, im_ref,
                w1a_ref, w1b_ref, b1_ref, w2_ref, b2_ref,
                w3g_ref, w3m_ref, b3_ref,
                out_ref):
    """Transposed (feature-on-sublane, batch-on-lane) NCF forward for one tile."""
    f32 = jnp.float32

    # GMF branch: Hadamard product, fully lane-dense on the VPU.        (E, TB)
    gmf = ue_ref[...].astype(f32) * ie_ref[...].astype(f32)

    # MLP layer 1, concat-free: h1 = relu(W1a @ um + W1b @ im + b1).    (2E, TB)
    h1 = (jnp.dot(w1a_ref[...], um_ref[...], preferred_element_type=f32)
          + jnp.dot(w1b_ref[...], im_ref[...], preferred_element_type=f32)
          + b1_ref[...])
    h1 = jnp.maximum(h1, 0.0)

    # MLP layer 2: h2 = relu(W2 @ h1 + b2).                             (E, TB)
    h2 = jnp.dot(w2_ref[...], h1.astype(w2_ref.dtype),
                 preferred_element_type=f32) + b2_ref[...]
    h2 = jnp.maximum(h2, 0.0)

    # NeuMF head (Linear(2E -> 1)): feature-axis (sublane) reduce gives a
    # lane-dense (1, TB) logit row directly -- no masked stores, no MXU N=1.
    logit = (jnp.sum(gmf * w3g_ref[...], axis=0, keepdims=True)
             + jnp.sum(h2 * w3m_ref[...], axis=0, keepdims=True)
             + b3_ref[...])                                             # (1, TB)

    # Exact sigmoid via a single EUP tanh: sigmoid(x) = 0.5*(tanh(x/2)+1).
    out_ref[...] = (0.5 * (jnp.tanh(0.5 * logit) + 1.0)).astype(out_ref.dtype)


def prepare_params(params, dtype=jnp.bfloat16):
    """One-time re-layout of the PyTorch-style parameters for the kernel.

    dtype=bfloat16 (default) halves HBM traffic for the bandwidth-bound
    embedding/activation streams on v5e/v6e/v7x; accumulation stays f32.
    Pass dtype=jnp.float32 for a bit-closer match to an f32 reference.
    """
    E = params["user_emb"].shape[1]        # 32
    M = params["user_emb_mlp"].shape[1]    # 64 = 2E
    w1 = params["w1"]                      # (2E, 4E) = (64, 128), torch Linear layout
    return dict(
        user_emb=params["user_emb"].astype(dtype),
        item_emb=params["item_emb"].astype(dtype),
        user_emb_mlp=params["user_emb_mlp"].astype(dtype),
        item_emb_mlp=params["item_emb_mlp"].astype(dtype),
        w1a=w1[:, :M].astype(dtype),                                   # (2E, 2E) user half
        w1b=w1[:, M:].astype(dtype),                                   # (2E, 2E) item half
        b1=params["b1"].reshape(-1, 1).astype(jnp.float32),            # (2E, 1)
        w2=params["w2"].astype(dtype),                                 # (E, 2E)
        b2=params["b2"].reshape(-1, 1).astype(jnp.float32),            # (E, 1)
        w3g=params["w3"][0, :E].reshape(-1, 1).astype(jnp.float32),    # (E, 1) head / GMF
        w3m=params["w3"][0, E:].reshape(-1, 1).astype(jnp.float32),    # (E, 1) head / MLP
        b3=params["b3"].reshape(1, 1).astype(jnp.float32),             # (1, 1)
    )


@functools.partial(jax.jit, static_argnames=("block_b",))
def ncf_forward(user_ids, movie_ids, prepared, *, block_b=2048):
    """Embedding gathers / transpose / padding in XLA; hot dense path in Pallas."""
    B = user_ids.shape[0]
    E = prepared["user_emb"].shape[1]          # 32
    M = prepared["user_emb_mlp"].shape[1]      # 64

    # Batch lives on the lane axis -> tile must be a multiple of 128.  Choose
    # tiles big enough for long DMAs / grid-overhead amortization, but small
    # enough that mid-size batches still give >= 2 tiles so the "parallel"
    # batch axis spans both v7x TensorCores (megacore split on v5e/v6e).
    block_b = _round_up(max(block_b, 128), 128)
    b128 = _round_up(B, 128)
    tb = min(block_b, max(128, _round_up(_cdiv(b128, 2), 128)))
    b_pad = _round_up(B, tb)
    pad = b_pad - B

    uid = jnp.pad(user_ids, (0, pad))          # pad with id 0 (valid row); tail sliced off
    mid = jnp.pad(movie_ids, (0, pad))

    # Embedding lookups (XLA fused row gather), presented feature-major
    # (feat, B_pad): features on sublanes, batch on lanes.
    ue_t = jnp.take(prepared["user_emb"], uid, axis=0).T        # (E,  B_pad)
    ie_t = jnp.take(prepared["item_emb"], mid, axis=0).T        # (E,  B_pad)
    um_t = jnp.take(prepared["user_emb_mlp"], uid, axis=0).T    # (2E, B_pad)
    im_t = jnp.take(prepared["item_emb_mlp"], mid, axis=0).T    # (2E, B_pad)

    w1a, w1b, b1 = prepared["w1a"], prepared["w1b"], prepared["b1"]
    w2, b2 = prepared["w2"], prepared["b2"]
    w3g, w3m, b3 = prepared["w3g"], prepared["w3m"], prepared["b3"]

    n_tiles = b_pad // tb
    grid = (n_tiles,)

    def act_spec(feat):
        # Triple-buffer the streamed activation inputs on deep grids; the DMA
        # is the exposed path for this HBM-bound kernel.
        if n_tiles >= 3:
            try:
                return pl.BlockSpec((feat, tb), lambda i: (0, i),
                                    pipeline_mode=pl.Buffered(3))
            except (TypeError, AttributeError):
                pass
        return pl.BlockSpec((feat, tb), lambda i: (0, i))

    def const_spec(x):
        return pl.BlockSpec(x.shape, lambda i: (0, 0))   # VMEM-resident across tiles

    # Advisory cost model: memory-bound (activation streams dominate bytes).
    act_itemsize = jnp.dtype(prepared["user_emb"].dtype).itemsize
    weights = (w1a, w1b, b1, w2, b2, w3g, w3m, b3)
    bytes_accessed = int(
        b_pad * 2 * (E + M) * act_itemsize                       # ue + ie + um + im
        + sum(int(x.size) * jnp.dtype(x.dtype).itemsize for x in weights)
        + b_pad * 4)                                             # output
    flops = int(b_pad * (2 * (2 * M * M) + 2 * E * M)            # three matmuls
                + b_pad * (E + 4 * E + 4 * E + 3 * M))           # gmf + head + relu/bias

    out = pl.pallas_call(
        _ncf_kernel,
        out_shape=jax.ShapeDtypeStruct((1, b_pad), jnp.float32),
        grid=grid,
        in_specs=[act_spec(E), act_spec(E), act_spec(M), act_spec(M),
                  const_spec(w1a), const_spec(w1b), const_spec(b1),
                  const_spec(w2), const_spec(b2),
                  const_spec(w3g), const_spec(w3m), const_spec(b3)],
        out_specs=pl.BlockSpec((1, tb), lambda i: (0, i)),
        compiler_params=pltpu.CompilerParams(
            dimension_semantics=("parallel",)),                  # megacore / 2-TC sharding
        cost_estimate=pl.CostEstimate(
            flops=flops, transcendentals=int(b_pad), bytes_accessed=bytes_accessed),
    )(ue_t, ie_t, um_t, im_t, w1a, w1b, b1, w2, b2, w3g, w3m, b3)

    return out.reshape(-1)[:B]                 # matches NeuMF_out.view(-1)


def ncf_reference(user_ids, movie_ids, params):
    """Pure-JAX reference matching the PyTorch module (eval mode)."""
    ue = params["user_emb"][user_ids]
    ie = params["item_emb"][movie_ids]
    um = params["user_emb_mlp"][user_ids]
    im = params["item_emb_mlp"][movie_ids]
    gmf = ue * ie
    x = jnp.concatenate([um, im], axis=-1)
    h1 = jax.nn.relu(x @ params["w1"].T + params["b1"])
    h2 = jax.nn.relu(h1 @ params["w2"].T + params["b2"])
    z = jnp.concatenate([gmf, h2], axis=-1)
    return jax.nn.sigmoid(z @ params["w3"].T + params["b3"]).reshape(-1)


def init_params(key, num_users, num_movies, embedding_dim=32, num_mlp_layers=2):
    mlp_emb_dim = embedding_dim * 2 ** (num_mlp_layers - 1)     # 64
    ks = jax.random.split(key, 10)

    def linear_init(kw, kb, fan_in, fan_out):
        bound = 1.0 / jnp.sqrt(fan_in)
        w = jax.random.uniform(kw, (fan_out, fan_in), jnp.float32, -bound, bound)
        b = jax.random.uniform(kb, (fan_out,), jnp.float32, -bound, bound)
        return w, b

    w1, b1 = linear_init(ks[4], ks[5], embedding_dim * 4, embedding_dim * 2)
    w2, b2 = linear_init(ks[6], ks[7], embedding_dim * 2, embedding_dim)
    w3, b3 = linear_init(ks[8], ks[9], embedding_dim * 2, 1)

    return dict(
        user_emb=jax.random.normal(ks[0], (num_users, embedding_dim), jnp.float32),
        item_emb=jax.random.normal(ks[1], (num_movies, embedding_dim), jnp.float32),
        user_emb_mlp=jax.random.normal(ks[2], (num_users, mlp_emb_dim), jnp.float32),
        item_emb_mlp=jax.random.normal(ks[3], (num_movies, mlp_emb_dim), jnp.float32),
        w1=w1, b1=b1, w2=w2, b2=b2, w3=w3, b3=b3,
    )


if __name__ == "__main__":
    num_users, num_movies, batch = 50, 40, 8
    key = jax.random.PRNGKey(0)
    kp, ku, km = jax.random.split(key, 3)

    params = init_params(kp, num_users, num_movies)

    user_ids = jax.random.randint(ku, (batch,), 0, num_users, dtype=jnp.int32)
    movie_ids = jax.random.randint(km, (batch,), 0, num_movies, dtype=jnp.int32)
    ref = ncf_reference(user_ids, movie_ids, params)

    # f32 path: tight check against the pure-JAX reference.
    prepared_f32 = prepare_params(params, dtype=jnp.float32)
    out_f32 = ncf_forward(user_ids, movie_ids, prepared_f32)
    jax.block_until_ready(out_f32)
    assert out_f32.shape == (batch,) and out_f32.dtype == jnp.float32
    assert bool(jnp.all((out_f32 >= 0.0) & (out_f32 <= 1.0)))
    assert bool(jnp.allclose(out_f32, ref, atol=5e-3, rtol=5e-3)), (out_f32, ref)

    # bf16 path (the production default for v5e/v6e/v7x): looser tolerance.
    prepared_bf16 = prepare_params(params)     # dtype=bfloat16 by default
    out_bf16 = ncf_forward(user_ids, movie_ids, prepared_bf16)
    jax.block_until_ready(out_bf16)
    assert out_bf16.shape == (batch,)
    assert bool(jnp.allclose(out_bf16, ref, atol=3e-2, rtol=3e-2)), (out_bf16, ref)

    # Multi-tile grid (exercises Buffered(3) pipelining) + ragged-tail path.
    ku2, km2 = jax.random.split(jax.random.PRNGKey(1))
    uid2 = jax.random.randint(ku2, (300,), 0, num_users, dtype=jnp.int32)
    mid2 = jax.random.randint(km2, (300,), 0, num_movies, dtype=jnp.int32)
    out2 = ncf_forward(uid2, mid2, prepared_f32, block_b=128)
    jax.block_until_ready(out2)
    ref2 = ncf_reference(uid2, mid2, params)
    assert out2.shape == (300,)
    assert bool(jnp.allclose(out2, ref2, atol=5e-3, rtol=5e-3)), (out2, ref2)

    print("KERNEL_OK")
</pallas_src>

<mosaic_0001>
module attributes {stable_mosaic.version = 11 : i64} {
  func.func @_ncf_kernel(%arg0: i32, %arg1: memref<32x128xf32, #tpu.memory_space<vmem>>, %arg2: memref<32x128xf32, #tpu.memory_space<vmem>>, %arg3: memref<64x128xf32, #tpu.memory_space<vmem>>, %arg4: memref<64x128xf32, #tpu.memory_space<vmem>>, %arg5: memref<64x64xf32, #tpu.memory_space<vmem>>, %arg6: memref<64x64xf32, #tpu.memory_space<vmem>>, %arg7: memref<64x1xf32, #tpu.memory_space<vmem>>, %arg8: memref<32x64xf32, #tpu.memory_space<vmem>>, %arg9: memref<32x1xf32, #tpu.memory_space<vmem>>, %arg10: memref<32x1xf32, #tpu.memory_space<vmem>>, %arg11: memref<32x1xf32, #tpu.memory_space<vmem>>, %arg12: memref<1x1xf32, #tpu.memory_space<vmem>>, %arg13: memref<1x128xf32, #tpu.memory_space<vmem>>) attributes {dimension_semantics = [#tpu.dimension_semantics<parallel>], iteration_bounds = array<i64: 1>, scalar_prefetch = 0 : i64, scratch_operands = 0 : i64, tpu.core_type = #tpu.core_type<tc>, window_params = [{transform_indices = @transform_0, window_bounds = array<i64: 32, 128>}, {transform_indices = @transform_1, window_bounds = array<i64: 32, 128>}, {transform_indices = @transform_2, window_bounds = array<i64: 64, 128>}, {transform_indices = @transform_3, window_bounds = array<i64: 64, 128>}, {pipeline_mode = #tpu.pipeline_mode<synchronous>, transform_indices = @transform_4, window_bounds = array<i64: 64, 64>}, {pipeline_mode = #tpu.pipeline_mode<synchronous>, transform_indices = @transform_5, window_bounds = array<i64: 64, 64>}, {pipeline_mode = #tpu.pipeline_mode<synchronous>, transform_indices = @transform_6, window_bounds = array<i64: 64, 1>}, {pipeline_mode = #tpu.pipeline_mode<synchronous>, transform_indices = @transform_7, window_bounds = array<i64: 32, 64>}, {pipeline_mode = #tpu.pipeline_mode<synchronous>, transform_indices = @transform_8, window_bounds = array<i64: 32, 1>}, {pipeline_mode = #tpu.pipeline_mode<synchronous>, transform_indices = @transform_9, window_bounds = array<i64: 32, 1>}, {pipeline_mode = #tpu.pipeline_mode<synchronous>, transform_indices = @transform_10, window_bounds = array<i64: 32, 1>}, {pipeline_mode = #tpu.pipeline_mode<synchronous>, transform_indices = @transform_11, window_bounds = array<i64: 1, 1>}, {transform_indices = @transform_12, window_bounds = array<i64: 1, 128>}]} {
    %c0 = arith.constant 0 : index
    %c0_0 = arith.constant 0 : index
    %0 = vector.load %arg1[%c0, %c0_0] : memref<32x128xf32, #tpu.memory_space<vmem>>, vector<32x128xf32>
    %c0_1 = arith.constant 0 : index
    %c0_2 = arith.constant 0 : index
    %1 = vector.load %arg2[%c0_1, %c0_2] : memref<32x128xf32, #tpu.memory_space<vmem>>, vector<32x128xf32>
    %2 = arith.mulf %0, %1 : vector<32x128xf32>
    %c0_3 = arith.constant 0 : index
    %c0_4 = arith.constant 0 : index
    %3 = vector.load %arg5[%c0_3, %c0_4] : memref<64x64xf32, #tpu.memory_space<vmem>>, vector<64x64xf32>
    %c0_5 = arith.constant 0 : index
    %c0_6 = arith.constant 0 : index
    %4 = vector.load %arg3[%c0_5, %c0_6] : memref<64x128xf32, #tpu.memory_space<vmem>>, vector<64x128xf32>
    %cst = arith.constant dense<0.000000e+00> : vector<64x128xf32>
    %5 = tpu.matmul %3, %4, %cst {dimension_numbers = #tpu.dot_dimension_numbers<[1], [0], [0], [1], [0, 0, 1, 1], [], []>} : vector<64x64xf32>, vector<64x128xf32>, vector<64x128xf32> -> vector<64x128xf32>
    %c0_7 = arith.constant 0 : index
    %c0_8 = arith.constant 0 : index
    %6 = vector.load %arg6[%c0_7, %c0_8] : memref<64x64xf32, #tpu.memory_space<vmem>>, vector<64x64xf32>
    %c0_9 = arith.constant 0 : index
    %c0_10 = arith.constant 0 : index
    %7 = vector.load %arg4[%c0_9, %c0_10] : memref<64x128xf32, #tpu.memory_space<vmem>>, vector<64x128xf32>
    %cst_11 = arith.constant dense<0.000000e+00> : vector<64x128xf32>
    %8 = tpu.matmul %6, %7, %cst_11 {dimension_numbers = #tpu.dot_dimension_numbers<[1], [0], [0], [1], [0, 0, 1, 1], [], []>} : vector<64x64xf32>, vector<64x128xf32>, vector<64x128xf32> -> vector<64x128xf32>
    %9 = arith.addf %5, %8 : vector<64x128xf32>
    %c0_12 = arith.constant 0 : index
    %c0_13 = arith.constant 0 : index
    %10 = vector.load %arg7[%c0_12, %c0_13] : memref<64x1xf32, #tpu.memory_space<vmem>>, vector<64x1xf32>
    %11 = vector.broadcast %10 : vector<64x1xf32> to vector<64x128xf32>
    %12 = arith.addf %9, %11 : vector<64x128xf32>
    %cst_14 = arith.constant 0.000000e+00 : f32
    %13 = vector.broadcast %cst_14 : f32 to vector<64x128xf32>
    %14 = arith.maximumf %12, %13 : vector<64x128xf32>
    %c0_15 = arith.constant 0 : index
    %c0_16 = arith.constant 0 : index
    %15 = vector.load %arg8[%c0_15, %c0_16] : memref<32x64xf32, #tpu.memory_space<vmem>>, vector<32x64xf32>
    %cst_17 = arith.constant dense<0.000000e+00> : vector<32x128xf32>
    %16 = tpu.matmul %15, %14, %cst_17 {dimension_numbers = #tpu.dot_dimension_numbers<[1], [0], [0], [1], [0, 0, 1, 1], [], []>} : vector<32x64xf32>, vector<64x128xf32>, vector<32x128xf32> -> vector<32x128xf32>
    %c0_18 = arith.constant 0 : index
    %c0_19 = arith.constant 0 : index
    %17 = vector.load %arg9[%c0_18, %c0_19] : memref<32x1xf32, #tpu.memory_space<vmem>>, vector<32x1xf32>
    %18 = vector.broadcast %17 : vector<32x1xf32> to vector<32x128xf32>
    %19 = arith.addf %16, %18 : vector<32x128xf32>
    %cst_20 = arith.constant 0.000000e+00 : f32
    %20 = vector.broadcast %cst_20 : f32 to vector<32x128xf32>
    %21 = arith.maximumf %19, %20 : vector<32x128xf32>
    %c0_21 = arith.constant 0 : index
    %c0_22 = arith.constant 0 : index
    %22 = vector.load %arg10[%c0_21, %c0_22] : memref<32x1xf32, #tpu.memory_space<vmem>>, vector<32x1xf32>
    %23 = vector.broadcast %22 : vector<32x1xf32> to vector<32x128xf32>
    %24 = arith.mulf %2, %23 : vector<32x128xf32>
    %cst_23 = arith.constant dense<0.000000e+00> : vector<128xf32>
    %25 = vector.multi_reduction <add>, %24, %cst_23 [0] : vector<32x128xf32> to vector<128xf32>
    %26 = vector.shape_cast %25 : vector<128xf32> to vector<1x128xf32>
    %c0_24 = arith.constant 0 : index
    %c0_25 = arith.constant 0 : index
    %27 = vector.load %arg11[%c0_24, %c0_25] : memref<32x1xf32, #tpu.memory_space<vmem>>, vector<32x1xf32>
    %28 = vector.broadcast %27 : vector<32x1xf32> to vector<32x128xf32>
    %29 = arith.mulf %21, %28 : vector<32x128xf32>
    %cst_26 = arith.constant dense<0.000000e+00> : vector<128xf32>
    %30 = vector.multi_reduction <add>, %29, %cst_26 [0] : vector<32x128xf32> to vector<128xf32>
    %31 = vector.shape_cast %30 : vector<128xf32> to vector<1x128xf32>
    %32 = arith.addf %26, %31 : vector<1x128xf32>
    %c0_27 = arith.constant 0 : index
    %c0_28 = arith.constant 0 : index
    %33 = vector.load %arg12[%c0_27, %c0_28] : memref<1x1xf32, #tpu.memory_space<vmem>>, vector<1x1xf32>
    %34 = vector.broadcast %33 : vector<1x1xf32> to vector<1x128xf32>
    %35 = arith.addf %32, %34 : vector<1x128xf32>
    %cst_29 = arith.constant 5.000000e-01 : f32
    %36 = vector.broadcast %cst_29 : f32 to vector<1x128xf32>
    %37 = arith.mulf %36, %35 : vector<1x128xf32>
    %38 = math.tanh %37 : vector<1x128xf32>
    %cst_30 = arith.constant 1.000000e+00 : f32
    %39 = vector.broadcast %cst_30 : f32 to vector<1x128xf32>
    %40 = arith.addf %38, %39 : vector<1x128xf32>
    %cst_31 = arith.constant 5.000000e-01 : f32
    %41 = vector.broadcast %cst_31 : f32 to vector<1x128xf32>
    %42 = arith.mulf %41, %40 : vector<1x128xf32>
    %c0_32 = arith.constant 0 : index
    %c0_33 = arith.constant 0 : index
    %43 = vector.load %arg13[%c0_32, %c0_33] : memref<1x128xf32, #tpu.memory_space<vmem>>, vector<1x128xf32>
    tpu.vector_store %arg13[%c0_32, %c0_33], %42 {strides = array<i32>} : memref<1x128xf32, #tpu.memory_space<vmem>>, vector<1x128xf32>,
    return
  }
  func.func @transform_0(%arg0: i32) -> (i32, i32) {
    %c0_i32 = arith.constant 0 : i32
    %c0_i32_0 = arith.constant 0 : i32
    return %c0_i32, %arg0 : i32, i32
  }
  func.func @transform_1(%arg0: i32) -> (i32, i32) {
    %c0_i32 = arith.constant 0 : i32
    %c0_i32_0 = arith.constant 0 : i32
    return %c0_i32, %arg0 : i32, i32
  }
  func.func @transform_2(%arg0: i32) -> (i32, i32) {
    %c0_i32 = arith.constant 0 : i32
    %c0_i32_0 = arith.constant 0 : i32
    return %c0_i32, %arg0 : i32, i32
  }
  func.func @transform_3(%arg0: i32) -> (i32, i32) {
    %c0_i32 = arith.constant 0 : i32
    %c0_i32_0 = arith.constant 0 : i32
    return %c0_i32, %arg0 : i32, i32
  }
  func.func @transform_4(%arg0: i32) -> (i32, i32) {
    %c0_i32 = arith.constant 0 : i32
    %c0_i32_0 = arith.constant 0 : i32
    %c0_i32_1 = arith.constant 0 : i32
    return %c0_i32, %c0_i32_0 : i32, i32
  }
  func.func @transform_5(%arg0: i32) -> (i32, i32) {
    %c0_i32 = arith.constant 0 : i32
    %c0_i32_0 = arith.constant 0 : i32
    %c0_i32_1 = arith.constant 0 : i32
    return %c0_i32, %c0_i32_0 : i32, i32
  }
  func.func @transform_6(%arg0: i32) -> (i32, i32) {
    %c0_i32 = arith.constant 0 : i32
    %c0_i32_0 = arith.constant 0 : i32
    %c0_i32_1 = arith.constant 0 : i32
    return %c0_i32, %c0_i32_0 : i32, i32
  }
  func.func @transform_7(%arg0: i32) -> (i32, i32) {
    %c0_i32 = arith.constant 0 : i32
    %c0_i32_0 = arith.constant 0 : i32
    %c0_i32_1 = arith.constant 0 : i32
    return %c0_i32, %c0_i32_0 : i32, i32
  }
  func.func @transform_8(%arg0: i32) -> (i32, i32) {
    %c0_i32 = arith.constant 0 : i32
    %c0_i32_0 = arith.constant 0 : i32
    %c0_i32_1 = arith.constant 0 : i32
    return %c0_i32, %c0_i32_0 : i32, i32
  }
  func.func @transform_9(%arg0: i32) -> (i32, i32) {
    %c0_i32 = arith.constant 0 : i32
    %c0_i32_0 = arith.constant 0 : i32
    %c0_i32_1 = arith.constant 0 : i32
    return %c0_i32, %c0_i32_0 : i32, i32
  }
  func.func @transform_10(%arg0: i32) -> (i32, i32) {
    %c0_i32 = arith.constant 0 : i32
    %c0_i32_0 = arith.constant 0 : i32
    %c0_i32_1 = arith.constant 0 : i32
    return %c0_i32, %c0_i32_0 : i32, i32
  }
  func.func @transform_11(%arg0: i32) -> (i32, i32) {
    %c0_i32 = arith.constant 0 : i32
    %c0_i32_0 = arith.constant 0 : i32
    %c0_i32_1 = arith.constant 0 : i32
    return %c0_i32, %c0_i32_0 : i32, i32
  }
  func.func @transform_12(%arg0: i32) -> (i32, i32) {
    %c0_i32 = arith.constant 0 : i32
    %c0_i32_0 = arith.constant 0 : i32
    return %c0_i32, %arg0 : i32, i32
  }
}

</mosaic_0001>

<llo_original>
// kernel: ncf_forward.1
$region0: #{ncf_forward.1}
  #allocation0 [shape = 'u32[]', space=smem, size = 0x4, offset = 0x4, fixed_abs, tag = 'smem constant byte address 0x4 - core index']
  #allocation1 [shape = 'u32[144,128]{1,0:T(1,128)}', space=vmem, size = 0x12000, scoped, tag = 'internal scratch']
  #allocation2 [shape = 'f32[1,1]{1,0:T(1,128)S(1)}', space=vmem, size = 0x200, scoped, tag = 'scoped memory for ncf_forward.1']
  %s0 = inlined_call_operand.vmem [shape: f32[32,128], index: 0, kind: input, shape index: {}]
  %s1 = inlined_call_operand.vmem [shape: f32[32,128], index: 1, kind: input, shape index: {}]
  %s2 = inlined_call_operand.vmem [shape: f32[64,128], index: 2, kind: input, shape index: {}]
  %s3 = inlined_call_operand.vmem [shape: f32[64,128], index: 3, kind: input, shape index: {}]
  %s4 = inlined_call_operand.vmem [shape: f32[64,64], index: 4, kind: input, shape index: {}]
  %s5 = inlined_call_operand.vmem [shape: f32[64,64], index: 5, kind: input, shape index: {}]
  %s6 = inlined_call_operand.vmem [shape: f32[64,1], index: 6, kind: input, shape index: {}]
  %s7 = inlined_call_operand.vmem [shape: f32[32,64], index: 7, kind: input, shape index: {}]
  %s8 = inlined_call_operand.vmem [shape: f32[32,1], index: 8, kind: input, shape index: {}]
  %s9 = inlined_call_operand.vmem [shape: f32[32,1], index: 9, kind: input, shape index: {}]
  %s10 = inlined_call_operand.vmem [shape: f32[32,1], index: 10, kind: input, shape index: {}]
  %s11 = inlined_call_operand.<no memory space> [shape: f32[1,1], index: 11, kind: input, shape index: {}]
  %s12 = inlined_call_operand.vmem [shape: f32[1,128], index: 12, kind: output, shape index: {}]
  %s13 = sld [smem:[#allocation0]]
  $region58: #{ncf_forward.1} parent=0
    _
  %s15 = ssub.s32 1, %s13
  %s16 = scalar_select 0, %s15, %s13
  %v17 = vstv %s11
  %18 = vst [vmem:[#allocation2] sm:$0x1] %v17
  // Predicated region
  $region2: #{ncf_forward.1} parent=0 // pred_check
    _
  $region3: #{ncf_forward.1} parent=0 // pred_check_branch
    %20 = sbr.rel (0) target = $region5
  $region4: #{ncf_forward.1} parent=0 // pred_region
    _
  $region5: #{ncf_forward.1} parent=0 // pred_fallthru
    _
  // Predicated region
  $region6: #{ncf_forward.1} parent=0 // pred_check
    _
  $region7: #{ncf_forward.1} parent=0 // pred_check_branch
    %22 = sbr.rel (0) target = $region9
  $region8: #{ncf_forward.1} parent=0 // pred_region
    _
  $region9: #{ncf_forward.1} parent=0 // pred_fallthru
    _
  // Predicated region
  $region10: #{ncf_forward.1} parent=0 // pred_check
    _
  $region11: #{ncf_forward.1} parent=0 // pred_check_branch
    %24 = sbr.rel (0) target = $region13
  $region12: #{ncf_forward.1} parent=0 // pred_region
    _
  $region13: #{ncf_forward.1} parent=0 // pred_fallthru
    _
  // Predicated region
  $region14: #{ncf_forward.1} parent=0 // pred_check
    _
  $region15: #{ncf_forward.1} parent=0 // pred_check_branch
    %26 = sbr.rel (0) target = $region17
  $region16: #{ncf_forward.1} parent=0 // pred_region
    _
  $region17: #{ncf_forward.1} parent=0 // pred_fallthru
    _
  // Predicated region
  $region18: #{ncf_forward.1} parent=0 // pred_check
    _
  $region19: #{ncf_forward.1} parent=0 // pred_check_branch
    %28 = sbr.rel (0) target = $region21
  $region20: #{ncf_forward.1} parent=0 // pred_region
    _
  $region21: #{ncf_forward.1} parent=0 // pred_fallthru
    _
  // Predicated region
  $region22: #{ncf_forward.1} parent=0 // pred_check
    _
  $region23: #{ncf_forward.1} parent=0 // pred_check_branch
    %30 = sbr.rel (0) target = $region25
  $region24: #{ncf_forward.1} parent=0 // pred_region
    _
  $region25: #{ncf_forward.1} parent=0 // pred_fallthru
    _
  // Predicated region
  $region26: #{ncf_forward.1} parent=0 // pred_check
    _
  $region27: #{ncf_forward.1} parent=0 // pred_check_branch
    %32 = sbr.rel (0) target = $region29
  $region28: #{ncf_forward.1} parent=0 // pred_region
    _
  $region29: #{ncf_forward.1} parent=0 // pred_fallthru
    _
  // Predicated region
  $region30: #{ncf_forward.1} parent=0 // pred_check
    _
  $region31: #{ncf_forward.1} parent=0 // pred_check_branch
    %34 = sbr.rel (0) target = $region33
  $region32: #{ncf_forward.1} parent=0 // pred_region
    _
  $region33: #{ncf_forward.1} parent=0 // pred_fallthru
    _
  // Predicated region
  $region34: #{ncf_forward.1} parent=0 // pred_check
    _
  $region35: #{ncf_forward.1} parent=0 // pred_check_branch
    %36 = sbr.rel (0) target = $region37
  $region36: #{ncf_forward.1} parent=0 // pred_region
    _
  $region37: #{ncf_forward.1} parent=0 // pred_fallthru
    _
  // Predicated region
  $region38: #{ncf_forward.1} parent=0 // pred_check
    _
  $region39: #{ncf_forward.1} parent=0 // pred_check_branch
    %38 = sbr.rel (0) target = $region41
  $region40: #{ncf_forward.1} parent=0 // pred_region
    _
  $region41: #{ncf_forward.1} parent=0 // pred_fallthru
    _
  // Predicated region
  $region42: #{ncf_forward.1} parent=0 // pred_check
    _
  $region43: #{ncf_forward.1} parent=0 // pred_check_branch
    %40 = sbr.rel (0) target = $region45
  $region44: #{ncf_forward.1} parent=0 // pred_region
    _
  $region45: #{ncf_forward.1} parent=0 // pred_fallthru
    _
  // Predicated region
  $region46: #{ncf_forward.1} parent=0 // pred_check
    _
  $region47: #{ncf_forward.1} parent=0 // pred_check_branch
    %42 = sbr.rel (0) target = $region49
  $region48: #{ncf_forward.1} parent=0 // pred_region
    _
  $region49: #{ncf_forward.1} parent=0 // pred_fallthru
    _
  %v43 = vld [vmem:[%s0] sm:$0xff]
  %v44 = vld [vmem:[%s0 + $0x8] sm:$0xff]
  %v45 = vld [vmem:[%s0 + $0x10] sm:$0xff]
  %v46 = vld [vmem:[%s0 + $0x18] sm:$0xff]
  %v47 = vld [vmem:[%s1] sm:$0xff]
  %v48 = vld [vmem:[%s1 + $0x8] sm:$0xff]
  %v49 = vld [vmem:[%s1 + $0x10] sm:$0xff]
  %v50 = vld [vmem:[%s1 + $0x18] sm:$0xff]
  %v51 = vmul.f32 %v43, %v47
  %v52 = vmul.f32 %v44, %v48
  %v53 = vmul.f32 %v45, %v49
  %v54 = vmul.f32 %v46, %v50
  %v55 = vld [vmem:[%s4] sm:$0xff]
  %v56 = vld [vmem:[%s4 + $0x8] sm:$0xff]
  %v57 = vld [vmem:[%s4 + $0x10] sm:$0xff]
  %v58 = vld [vmem:[%s4 + $0x18] sm:$0xff]
  %v59 = vld [vmem:[%s4 + $0x20] sm:$0xff]
  %v60 = vld [vmem:[%s4 + $0x28] sm:$0xff]
  %v61 = vld [vmem:[%s4 + $0x30] sm:$0xff]
  %v62 = vld [vmem:[%s4 + $0x38] sm:$0xff]
  %v63 = vld [vmem:[%s2] sm:$0xff]
  %v64 = vld [vmem:[%s2 + $0x8] sm:$0xff]
  %v65 = vld [vmem:[%s2 + $0x10] sm:$0xff]
  %v66 = vld [vmem:[%s2 + $0x18] sm:$0xff]
  %v67 = vld [vmem:[%s2 + $0x20] sm:$0xff]
  %v68 = vld [vmem:[%s2 + $0x28] sm:$0xff]
  %v69 = vld [vmem:[%s2 + $0x30] sm:$0xff]
  %v70 = vld [vmem:[%s2 + $0x38] sm:$0xff]
  %v71 = vld [vmem:[%s5] sm:$0xff]
  %v72 = vld [vmem:[%s5 + $0x8] sm:$0xff]
  %v73 = vld [vmem:[%s5 + $0x10] sm:$0xff]
  %v74 = vld [vmem:[%s5 + $0x18] sm:$0xff]
  %v75 = vld [vmem:[%s5 + $0x20] sm:$0xff]
  %v76 = vld [vmem:[%s5 + $0x28] sm:$0xff]
  %v77 = vld [vmem:[%s5 + $0x30] sm:$0xff]
  %v78 = vld [vmem:[%s5 + $0x38] sm:$0xff]
  %v79 = vld [vmem:[%s3] sm:$0xff]
  %v80 = vld [vmem:[%s3 + $0x8] sm:$0xff]
  %v81 = vld [vmem:[%s3 + $0x10] sm:$0xff]
  %v82 = vld [vmem:[%s3 + $0x18] sm:$0xff]
  %v83 = vld [vmem:[%s3 + $0x20] sm:$0xff]
  %v84 = vld [vmem:[%s3 + $0x28] sm:$0xff]
  %v85 = vld [vmem:[%s3 + $0x30] sm:$0xff]
  %v86 = vld [vmem:[%s3 + $0x38] sm:$0xff]
  %vm87 = vcmask 523264
  %v89 = vsel %vm87, %v71, 0
  %v92 = vsel %vm87, %v72, 0
  %v95 = vsel %vm87, %v73, 0
  %v98 = vsel %vm87, %v74, 0
  %v101 = vsel %vm87, %v75, 0
  %v104 = vsel %vm87, %v76, 0
  %v107 = vsel %vm87, %v77, 0
  %v110 = vsel %vm87, %v78, 0
  %112 = vmatprep.subr.mxu0 0.0
  %113 = vmatpush1.msra.mxu0 %v79
  %114 = vmatprep.subr.mxu0 0.0
  %115 = vmatpush1.msra.mxu0 %v80
  %116 = vmatprep.subr.mxu0 0.0
  %117 = vmatpush1.msra.mxu0 %v81
  %118 = vmatprep.subr.mxu0 0.0
  %119 = vmatpush1.msra.mxu0 %v82
  %120 = vmatprep.subr.mxu0 0.0
  %121 = vmatpush1.msra.mxu0 %v83
  %122 = vmatprep.subr.mxu0 0.0
  %123 = vmatpush1.msra.mxu0 %v84
  %124 = vmatprep.subr.mxu0 0.0
  %125 = vmatpush1.msra.mxu0 %v85
  %126 = vmatprep.subr.mxu0 0.0
  %127 = vmatpush1.msra.mxu0 %v86
  %128 = vmatprep.subr.mxu0 0.0
  %129 = vmatpush1.msra.mxu0 0.0
  %130 = vmatprep.subr.mxu0 0.0
  %131 = vmatpush1.msra.mxu0 0.0
  %132 = vmatprep.subr.mxu0 0.0
  %133 = vmatpush1.msra.mxu0 0.0
  %134 = vmatprep.subr.mxu0 0.0
  %135 = vmatpush1.msra.mxu0 0.0
  %136 = vmatprep.subr.mxu0 0.0
  %137 = vmatpush1.msra.mxu0 0.0
  %138 = vmatprep.subr.mxu0 0.0
  %139 = vmatpush1.msra.mxu0 0.0
  %140 = vmatprep.subr.mxu0 0.0
  %141 = vmatpush1.msra.mxu0 0.0
  %142 = vmatprep.subr.mxu0 0.0
  %143 = vmatpush1.msra.mxu0 0.0
  %144 = vmatprep.subr.mxu0 0.0
  %145 = vmatpush1.msra.mxu0 0.0
  %146 = vmatprep.subr.mxu0 0.0
  %147 = vmatpush1.msra.mxu0 0.0
  %148 = vmatprep.subr.mxu0 0.0
  %149 = vmatpush1.msra.mxu0 0.0
  %150 = vmatprep.subr.mxu0 0.0
  %151 = vmatpush1.msra.mxu0 0.0
  %152 = vmatprep.subr.mxu0 0.0
  %153 = vmatpush1.msra.mxu0 0.0
  %154 = vmatprep.subr.mxu0 0.0
  %155 = vmatpush1.msra.mxu0 0.0
  %156 = vmatprep.subr.mxu0 0.0
  %157 = vmatpush1.msra.mxu0 0.0
  %158 = vmatprep.subr.mxu0 0.0
  %159 = vmatpush1.msra.mxu0 0.0
  %160 = vmatprep.subr.mxu0 0.0
  %161 = vmatpush1.msra.mxu0 0.0
  %162 = vmatprep.subr.mxu0 0.0
  %163 = vmatpush1.msra.mxu0 0.0
  %164 = vmatprep.subr.mxu0 0.0
  %165 = vmatpush1.msra.mxu0 0.0
  %166 = vmatprep.subr.mxu0 0.0
  %167 = vmatpush1.msra.mxu0 0.0
  %168 = vmatprep.subr.mxu0 0.0
  %169 = vmatpush1.msra.mxu0 0.0
  %170 = vmatprep.subr.mxu0 0.0
  %171 = vmatpush1.msra.mxu0 0.0
  %172 = vmatprep.subr.mxu0 0.0
  %173 = vmatpush1.msra.mxu0 0.0
  %174 = vmatprep.subr.mxu0 0.0
  %175 = vmatpush1.msra.mxu0 0.0
  %176 = vmatprep.mubr.f32.mxu0 0.0
  %177 = vmatmul.mubr.f32.gmra.mrb[0].mxu0 %v89
  %v178 = vpop.f32.mrb[0].mxu0
  %v179 = vadd.f32 0.0, %v178
  %v180 = vpop.f32.mrb[0].mxu0
  %181 = vmatprep.mubr.f32.mxu0 0.0
  %182 = vmatmul.mubr.f32.gmra.mrb[0].mxu0 %v92
  %v183 = vpop.f32.mrb[0].mxu0
  %v184 = vadd.f32 0.0, %v183
  %v185 = vpop.f32.mrb[0].mxu0
  %186 = vmatprep.mubr.f32.mxu0 0.0
  %187 = vmatmul.mubr.f32.gmra.mrb[0].mxu0 %v95
  %v188 = vpop.f32.mrb[0].mxu0
  %v189 = vadd.f32 0.0, %v188
  %v190 = vpop.f32.mrb[0].mxu0
  %191 = vmatprep.mubr.f32.mxu0 0.0
  %192 = vmatmul.mubr.f32.gmra.mrb[0].mxu0 %v98
  %v193 = vpop.f32.mrb[0].mxu0
  %v194 = vadd.f32 0.0, %v193
  %v195 = vpop.f32.mrb[0].mxu0
  %196 = vmatprep.mubr.f32.mxu0 0.0
  %197 = vmatmul.mubr.f32.gmra.mrb[0].mxu0 %v101
  %v198 = vpop.f32.mrb[0].mxu0
  %v199 = vadd.f32 0.0, %v198
  %v200 = vpop.f32.mrb[0].mxu0
  %201 = vmatprep.mubr.f32.mxu0 0.0
  %202 = vmatmul.mubr.f32.gmra.mrb[0].mxu0 %v104
  %v203 = vpop.f32.mrb[0].mxu0
  %v204 = vadd.f32 0.0, %v203
  %v205 = vpop.f32.mrb[0].mxu0
  %206 = vmatprep.mubr.f32.mxu0 0.0
  %207 = vmatmul.mubr.f32.gmra.mrb[0].mxu0 %v107
  %v208 = vpop.f32.mrb[0].mxu0
  %v209 = vadd.f32 0.0, %v208
  %v210 = vpop.f32.mrb[0].mxu0
  %211 = vmatprep.mubr.f32.mxu0 0.0
  %212 = vmatmul.mubr.f32.gmra.mrb[0].mxu0 %v110
  %v213 = vpop.f32.mrb[0].mxu0
  %v214 = vadd.f32 0.0, %v213
  %v215 = vpop.f32.mrb[0].mxu0
  %216 = vdwg.mxu0
  %v218 = vsel %vm87, %v55, 0
  %v221 = vsel %vm87, %v56, 0
  %v224 = vsel %vm87, %v57, 0
  %v227 = vsel %vm87, %v58, 0
  %v230 = vsel %vm87, %v59, 0
  %v233 = vsel %vm87, %v60, 0
  %v236 = vsel %vm87, %v61, 0
  %v239 = vsel %vm87, %v62, 0
  %241 = vmatprep.subr.mxu0 0.0
  %242 = vmatpush1.msra.mxu0 %v63
  %243 = vmatprep.subr.mxu0 0.0
  %244 = vmatpush1.msra.mxu0 %v64
  %245 = vmatprep.subr.mxu0 0.0
  %246 = vmatpush1.msra.mxu0 %v65
  %247 = vmatprep.subr.mxu0 0.0
  %248 = vmatpush1.msra.mxu0 %v66
  %249 = vmatprep.subr.mxu0 0.0
  %250 = vmatpush1.msra.mxu0 %v67
  %251 = vmatprep.subr.mxu0 0.0
  %252 = vmatpush1.msra.mxu0 %v68
  %253 = vmatprep.subr.mxu0 0.0
  %254 = vmatpush1.msra.mxu0 %v69
  %255 = vmatprep.subr.mxu0 0.0
  %256 = vmatpush1.msra.mxu0 %v70
  %257 = vmatprep.subr.mxu0 0.0
  %258 = vmatpush1.msra.mxu0 0.0
  %259 = vmatprep.subr.mxu0 0.0
  %260 = vmatpush1.msra.mxu0 0.0
  %261 = vmatprep.subr.mxu0 0.0
  %262 = vmatpush1.msra.mxu0 0.0
  %263 = vmatprep.subr.mxu0 0.0
  %264 = vmatpush1.msra.mxu0 0.0
  %265 = vmatprep.subr.mxu0 0.0
  %266 = vmatpush1.msra.mxu0 0.0
  %267 = vmatprep.subr.mxu0 0.0
  %268 = vmatpush1.msra.mxu0 0.0
  %269 = vmatprep.subr.mxu0 0.0
  %270 = vmatpush1.msra.mxu0 0.0
  %271 = vmatprep.subr.mxu0 0.0
  %272 = vmatpush1.msra.mxu0 0.0
  %273 = vmatprep.subr.mxu0 0.0
  %274 = vmatpush1.msra.mxu0 0.0
  %275 = vmatprep.subr.mxu0 0.0
  %276 = vmatpush1.msra.mxu0 0.0
  %277 = vmatprep.subr.mxu0 0.0
  %278 = vmatpush1.msra.mxu0 0.0
  %279 = vmatprep.subr.mxu0 0.0
  %280 = vmatpush1.msra.mxu0 0.0
  %281 = vmatprep.subr.mxu0 0.0
  %282 = vmatpush1.msra.mxu0 0.0
  %283 = vmatprep.subr.mxu0 0.0
  %284 = vmatpush1.msra.mxu0 0.0
  %285 = vmatprep.subr.mxu0 0.0
  %286 = vmatpush1.msra.mxu0 0.0
  %287 = vmatprep.subr.mxu0 0.0
  %288 = vmatpush1.msra.mxu0 0.0
  %289 = vmatprep.subr.mxu0 0.0
  %290 = vmatpush1.msra.mxu0 0.0
  %291 = vmatprep.subr.mxu0 0.0
  %292 = vmatpush1.msra.mxu0 0.0
  %293 = vmatprep.subr.mxu0 0.0
  %294 = vmatpush1.msra.mxu0 0.0
  %295 = vmatprep.subr.mxu0 0.0
  %296 = vmatpush1.msra.mxu0 0.0
  %297 = vmatprep.subr.mxu0 0.0
  %298 = vmatpush1.msra.mxu0 0.0
  %299 = vmatprep.subr.mxu0 0.0
  %300 = vmatpush1.msra.mxu0 0.0
  %301 = vmatprep.subr.mxu0 0.0
  %302 = vmatpush1.msra.mxu0 0.0
  %303 = vmatprep.subr.mxu0 0.0
  %304 = vmatpush1.msra.mxu0 0.0
  %305 = vmatprep.mubr.f32.mxu0 0.0
  %306 = vmatmul.mubr.f32.gmra.mrb[0].mxu0 %v218
  %v307 = vpop.f32.mrb[0].mxu0
  %v308 = vadd.f32 %v179, %v307
  %v309 = vpop.f32.mrb[0].mxu0
  %310 = vmatprep.mubr.f32.mxu0 0.0
  %311 = vmatmul.mubr.f32.gmra.mrb[0].mxu0 %v221
  %v312 = vpop.f32.mrb[0].mxu0
  %v313 = vadd.f32 %v184, %v312
  %v314 = vpop.f32.mrb[0].mxu0
  %315 = vmatprep.mubr.f32.mxu0 0.0
  %316 = vmatmul.mubr.f32.gmra.mrb[0].mxu0 %v224
  %v317 = vpop.f32.mrb[0].mxu0
  %v318 = vadd.f32 %v189, %v317
  %v319 = vpop.f32.mrb[0].mxu0
  %320 = vmatprep.mubr.f32.mxu0 0.0
  %321 = vmatmul.mubr.f32.gmra.mrb[0].mxu0 %v227
  %v322 = vpop.f32.mrb[0].mxu0
  %v323 = vadd.f32 %v194, %v322
  %v324 = vpop.f32.mrb[0].mxu0
  %325 = vmatprep.mubr.f32.mxu0 0.0
  %326 = vmatmul.mubr.f32.gmra.mrb[0].mxu0 %v230
  %v327 = vpop.f32.mrb[0].mxu0
  %v328 = vadd.f32 %v199, %v327
  %v329 = vpop.f32.mrb[0].mxu0
  %330 = vmatprep.mubr.f32.mxu0 0.0
  %331 = vmatmul.mubr.f32.gmra.mrb[0].mxu0 %v233
  %v332 = vpop.f32.mrb[0].mxu0
  %v333 = vadd.f32 %v204, %v332
  %v334 = vpop.f32.mrb[0].mxu0
  %335 = vmatprep.mubr.f32.mxu0 0.0
  %336 = vmatmul.mubr.f32.gmra.mrb[0].mxu0 %v236
  %v337 = vpop.f32.mrb[0].mxu0
  %v338 = vadd.f32 %v209, %v337
  %v339 = vpop.f32.mrb[0].mxu0
  %340 = vmatprep.mubr.f32.mxu0 0.0
  %341 = vmatmul.mubr.f32.gmra.mrb[0].mxu0 %v239
  %v342 = vpop.f32.mrb[0].mxu0
  %v343 = vadd.f32 %v214, %v342
  %v344 = vpop.f32.mrb[0].mxu0
  %345 = vdwg.mxu0
  %v346 = vld [vmem:[%s6] sm:$0xff]
  %v347 = vld [vmem:[%s6 + $0x8] sm:$0xff]
  %v348 = vld [vmem:[%s6 + $0x10] sm:$0xff]
  %v349 = vld [vmem:[%s6 + $0x18] sm:$0xff]
  %v350 = vld [vmem:[%s6 + $0x20] sm:$0xff]
  %v351 = vld [vmem:[%s6 + $0x28] sm:$0xff]
  %v352 = vld [vmem:[%s6 + $0x30] sm:$0xff]
  %v353 = vld [vmem:[%s6 + $0x38] sm:$0xff]
  %355 = vset.pattern.permute.xlu0 0
  %356 = vperm.xlu0 %355, %v346
  %v357 = vpop.permute.xlu0 %356
  %360 = vset.pattern.permute.xlu0 0
  %361 = vperm.xlu0 %360, %v347
  %v362 = vpop.permute.xlu0 %361
  %365 = vset.pattern.permute.xlu0 0
  %366 = vperm.xlu0 %365, %v348
  %v367 = vpop.permute.xlu0 %366
  %370 = vset.pattern.permute.xlu0 0
  %371 = vperm.xlu0 %370, %v349
  %v372 = vpop.permute.xlu0 %371
  %375 = vset.pattern.permute.xlu0 0
  %376 = vperm.xlu0 %375, %v350
  %v377 = vpop.permute.xlu0 %376
  %380 = vset.pattern.permute.xlu0 0
  %381 = vperm.xlu0 %380, %v351
  %v382 = vpop.permute.xlu0 %381
  %385 = vset.pattern.permute.xlu0 0
  %386 = vperm.xlu0 %385, %v352
  %v387 = vpop.permute.xlu0 %386
  %390 = vset.pattern.permute.xlu0 0
  %391 = vperm.xlu0 %390, %v353
  %v392 = vpop.permute.xlu0 %391
  %v394 = vadd.f32 %v308, %v357
  %v395 = vadd.f32 %v313, %v362
  %v396 = vadd.f32 %v318, %v367
  %v397 = vadd.f32 %v323, %v372
  %v398 = vadd.f32 %v328, %v377
  %v399 = vadd.f32 %v333, %v382
  %v400 = vadd.f32 %v338, %v387
  %v401 = vadd.f32 %v343, %v392
  %v402 = vmax.f32 %v394, 0.0
  %v403 = vmax.f32 %v395, 0.0
  %v404 = vmax.f32 %v396, 0.0
  %v405 = vmax.f32 %v397, 0.0
  %v406 = vmax.f32 %v398, 0.0
  %v407 = vmax.f32 %v399, 0.0
  %v408 = vmax.f32 %v400, 0.0
  %v409 = vmax.f32 %v401, 0.0
  %v410 = vld [vmem:[%s7] sm:$0xff]
  %v411 = vld [vmem:[%s7 + $0x8] sm:$0xff]
  %v412 = vld [vmem:[%s7 + $0x10] sm:$0xff]
  %v413 = vld [vmem:[%s7 + $0x18] sm:$0xff]
  %v414 = vld [vmem:[%s8] sm:$0xff]
  %v415 = vld [vmem:[%s8 + $0x8] sm:$0xff]
  %v416 = vld [vmem:[%s8 + $0x10] sm:$0xff]
  %v417 = vld [vmem:[%s8 + $0x18] sm:$0xff]
  %419 = vset.pattern.permute.xlu0 0
  %420 = vperm.xlu0 %419, %v414
  %v421 = vpop.permute.xlu0 %420
  %424 = vset.pattern.permute.xlu0 0
  %425 = vperm.xlu0 %424, %v415
  %v426 = vpop.permute.xlu0 %425
  %429 = vset.pattern.permute.xlu0 0
  %430 = vperm.xlu0 %429, %v416
  %v431 = vpop.permute.xlu0 %430
  %434 = vset.pattern.permute.xlu0 0
  %435 = vperm.xlu0 %434, %v417
  %v436 = vpop.permute.xlu0 %435
  %v439 = vsel %vm87, %v410, 0
  %v442 = vsel %vm87, %v411, 0
  %v445 = vsel %vm87, %v412, 0
  %v448 = vsel %vm87, %v413, 0
  %450 = vmatprep.subr.mxu0 0.0
  %451 = vmatpush1.msra.mxu0 %v402
  %452 = vmatprep.subr.mxu0 0.0
  %453 = vmatpush1.msra.mxu0 %v403
  %454 = vmatprep.subr.mxu0 0.0
  %455 = vmatpush1.msra.mxu0 %v404
  %456 = vmatprep.subr.mxu0 0.0
  %457 = vmatpush1.msra.mxu0 %v405
  %458 = vmatprep.subr.mxu0 0.0
  %459 = vmatpush1.msra.mxu0 %v406
  %460 = vmatprep.subr.mxu0 0.0
  %461 = vmatpush1.msra.mxu0 %v407
  %462 = vmatprep.subr.mxu0 0.0
  %463 = vmatpush1.msra.mxu0 %v408
  %464 = vmatprep.subr.mxu0 0.0
  %465 = vmatpush1.msra.mxu0 %v409
  %466 = vmatprep.subr.mxu0 0.0
  %467 = vmatpush1.msra.mxu0 0.0
  %468 = vmatprep.subr.mxu0 0.0
  %469 = vmatpush1.msra.mxu0 0.0
  %470 = vmatprep.subr.mxu0 0.0
  %471 = vmatpush1.msra.mxu0 0.0
  %472 = vmatprep.subr.mxu0 0.0
  %473 = vmatpush1.msra.mxu0 0.0
  %474 = vmatprep.subr.mxu0 0.0
  %475 = vmatpush1.msra.mxu0 0.0
  %476 = vmatprep.subr.mxu0 0.0
  %477 = vmatpush1.msra.mxu0 0.0
  %478 = vmatprep.subr.mxu0 0.0
  %479 = vmatpush1.msra.mxu0 0.0
  %480 = vmatprep.subr.mxu0 0.0
  %481 = vmatpush1.msra.mxu0 0.0
  %482 = vmatprep.subr.mxu0 0.0
  %483 = vmatpush1.msra.mxu0 0.0
  %484 = vmatprep.subr.mxu0 0.0
  %485 = vmatpush1.msra.mxu0 0.0
  %486 = vmatprep.subr.mxu0 0.0
  %487 = vmatpush1.msra.mxu0 0.0
  %488 = vmatprep.subr.mxu0 0.0
  %489 = vmatpush1.msra.mxu0 0.0
  %490 = vmatprep.subr.mxu0 0.0
  %491 = vmatpush1.msra.mxu0 0.0
  %492 = vmatprep.subr.mxu0 0.0
  %493 = vmatpush1.msra.mxu0 0.0
  %494 = vmatprep.subr.mxu0 0.0
  %495 = vmatpush1.msra.mxu0 0.0
  %496 = vmatprep.subr.mxu0 0.0
  %497 = vmatpush1.msra.mxu0 0.0
  %498 = vmatprep.subr.mxu0 0.0
  %499 = vmatpush1.msra.mxu0 0.0
  %500 = vmatprep.subr.mxu0 0.0
  %501 = vmatpush1.msra.mxu0 0.0
  %502 = vmatprep.subr.mxu0 0.0
  %503 = vmatpush1.msra.mxu0 0.0
  %504 = vmatprep.subr.mxu0 0.0
  %505 = vmatpush1.msra.mxu0 0.0
  %506 = vmatprep.subr.mxu0 0.0
  %507 = vmatpush1.msra.mxu0 0.0
  %508 = vmatprep.subr.mxu0 0.0
  %509 = vmatpush1.msra.mxu0 0.0
  %510 = vmatprep.subr.mxu0 0.0
  %511 = vmatpush1.msra.mxu0 0.0
  %512 = vmatprep.subr.mxu0 0.0
  %513 = vmatpush1.msra.mxu0 0.0
  %514 = vmatprep.mubr.f32.mxu0 0.0
  %515 = vmatmul.mubr.f32.gmra.mrb[0].mxu0 %v439
  %v516 = vpop.f32.mrb[0].mxu0
  %v517 = vadd.f32 %v421, %v516
  %v518 = vpop.f32.mrb[0].mxu0
  %519 = vmatprep.mubr.f32.mxu0 0.0
  %520 = vmatmul.mubr.f32.gmra.mrb[0].mxu0 %v442
  %v521 = vpop.f32.mrb[0].mxu0
  %v522 = vadd.f32 %v426, %v521
  %v523 = vpop.f32.mrb[0].mxu0
  %524 = vmatprep.mubr.f32.mxu0 0.0
  %525 = vmatmul.mubr.f32.gmra.mrb[0].mxu0 %v445
  %v526 = vpop.f32.mrb[0].mxu0
  %v527 = vadd.f32 %v431, %v526
  %v528 = vpop.f32.mrb[0].mxu0
  %529 = vmatprep.mubr.f32.mxu0 0.0
  %530 = vmatmul.mubr.f32.gmra.mrb[0].mxu0 %v448
  %v531 = vpop.f32.mrb[0].mxu0
  %v532 = vadd.f32 %v436, %v531
  %v533 = vpop.f32.mrb[0].mxu0
  %534 = vdwg.mxu0
  %v535 = vmax.f32 %v517, 0.0
  %v536 = vmax.f32 %v522, 0.0
  %v537 = vmax.f32 %v527, 0.0
  %v538 = vmax.f32 %v532, 0.0
  %v539 = vld [vmem:[%s9] sm:$0xff]
  %v540 = vld [vmem:[%s9 + $0x8] sm:$0xff]
  %v541 = vld [vmem:[%s9 + $0x10] sm:$0xff]
  %v542 = vld [vmem:[%s9 + $0x18] sm:$0xff]
  %544 = vset.pattern.permute.xlu0 0
  %545 = vperm.xlu0 %544, %v539
  %v546 = vpop.permute.xlu0 %545
  %549 = vset.pattern.permute.xlu0 0
  %550 = vperm.xlu0 %549, %v540
  %v551 = vpop.permute.xlu0 %550
  %554 = vset.pattern.permute.xlu0 0
  %555 = vperm.xlu0 %554, %v541
  %v556 = vpop.permute.xlu0 %555
  %559 = vset.pattern.permute.xlu0 0
  %560 = vperm.xlu0 %559, %v542
  %v561 = vpop.permute.xlu0 %560
  %v563 = vmul.f32 %v51, %v546
  %v564 = vmul.f32 %v52, %v551
  %v565 = vmul.f32 %v53, %v556
  %v566 = vmul.f32 %v54, %v561
  %v567 = vadd.f32 %v563, %v564
  %v568 = vadd.f32 %v567, %v565
  %v569 = vadd.f32 %v568, %v566
  %v570 = vrot.slane %v569, 4
  %v571 = vadd.f32 %v569, %v570
  %v572 = vrot.slane %v571, 2
  %v573 = vadd.f32 %v571, %v572
  %v574 = vrot.slane %v573, 1
  %v575 = vadd.f32 %v573, %v574
  %v576 = vld [vmem:[%s10] sm:$0xff]
  %v577 = vld [vmem:[%s10 + $0x8] sm:$0xff]
  %v578 = vld [vmem:[%s10 + $0x10] sm:$0xff]
  %v579 = vld [vmem:[%s10 + $0x18] sm:$0xff]
  %581 = vset.pattern.permute.xlu0 0
  %582 = vperm.xlu0 %581, %v576
  %v583 = vpop.permute.xlu0 %582
  %586 = vset.pattern.permute.xlu0 0
  %587 = vperm.xlu0 %586, %v577
  %v588 = vpop.permute.xlu0 %587
  %591 = vset.pattern.permute.xlu0 0
  %592 = vperm.xlu0 %591, %v578
  %v593 = vpop.permute.xlu0 %592
  %596 = vset.pattern.permute.xlu0 0
  %597 = vperm.xlu0 %596, %v579
  %v598 = vpop.permute.xlu0 %597
  %v600 = vmul.f32 %v535, %v583
  %v601 = vmul.f32 %v536, %v588
  %v602 = vmul.f32 %v537, %v593
  %v603 = vmul.f32 %v538, %v598
  %v604 = vadd.f32 %v600, %v601
  %v605 = vadd.f32 %v604, %v602
  %v606 = vadd.f32 %v605, %v603
  %v607 = vrot.slane %v606, 4
  %v608 = vadd.f32 %v606, %v607
  %v609 = vrot.slane %v608, 2
  %v610 = vadd.f32 %v608, %v609
  %v611 = vrot.slane %v610, 1
  %v612 = vadd.f32 %v610, %v611
  %v613 = vadd.f32 %v575, %v612
  %v614 = vld [vmem:[#allocation2] sm:$0x1]
  %616 = vset.pattern.permute.xlu0 0
  %617 = vperm.xlu0 %616, %v614
  %v618 = vpop.permute.xlu0 %617
  %v620 = vlaneseq
  %v621 = vshrl.u32 %v620, 7
  %v622 = vsub.s32 0, %v621
  %v623 = vrot.slane %v618, %v622
  %v624 = vadd.f32 %v613, %v623
  %v625 = vmul.f32 %v624, 0.5
  %v626 = vtanh.pop %v625
  %v627 = vadd.f32 %v626, 1.0
  %v628 = vmul.f32 %v627, 0.5
  %629 = vst [vmem:[%s12] sm:$0x1] %v628
  // Predicated region
  $region50: #{ncf_forward.1} parent=0 // pred_check
    _
  $region51: #{ncf_forward.1} parent=0 // pred_check_branch
    %631 = sbr.rel (0) target = $region53
  $region52: #{ncf_forward.1} parent=0 // pred_region
    _
  $region53: #{ncf_forward.1} parent=0 // pred_fallthru
    _
  // Predicated region
  $region54: #{ncf_forward.1} parent=0 // pred_check
    _
  $region55: #{ncf_forward.1} parent=0 // pred_check_branch
    %633 = sbr.rel (0) target = $region57
  $region56: #{ncf_forward.1} parent=0 // pred_region
    _
  $region57: #{ncf_forward.1} parent=0 // pred_fallthru
    _

</llo_original>
